<compile_context>
chip_gen: v5e
topology: v5e:2x2
jax: 0.10.0
libtpu: 0.0.40
codegen_flags: <defaults>
</compile_context>

<pallas_src>
import functools

import jax
import jax.numpy as jnp
from jax.experimental import pallas as pl
from jax.experimental.pallas import tpu as pltpu


# ----------------------------------------------------------------------------
# Tile-size helpers
# ----------------------------------------------------------------------------
def _pick_batch_tile(batch, dim, n_arrays, itemsize, budget_bytes=8 << 20):
    """Batch tile for the loss kernels: double-buffered input tiles <= budget."""
    tb = budget_bytes // max(1, 2 * n_arrays * dim * itemsize)
    tb = max(8, min(1024, (tb // 8) * 8))
    if batch <= tb:
        return batch          # full extent -> always a legal block shape
    return tb                  # multiple of 8 -> legal sublane tiling


def _rating_tiles(n_u, n_i, dim, itemsize, budget_bytes=24 << 20):
    """(TM, TN) tiles for rating(): fit double-buffered VMEM on v5e/v6e/v7x."""
    tm = n_u if n_u <= 256 else 256          # multiple of 8 (and 128) when tiled
    tn = n_i if n_i <= 1024 else 1024        # multiple of 128 when tiled

    def footprint(tm_, tn_):
        # 2x double-buffered input tiles + 2x output tile (f32)
        return 2 * (tm_ + tn_) * dim * itemsize + 2 * tm_ * tn_ * 4

    while n_i > tn and tn > 128 and footprint(tm, tn) > budget_bytes:
        tn //= 2
    while n_u > tm and tm > 8 and footprint(tm, tn) > budget_bytes:
        tm //= 2
    return tm, tn


# ----------------------------------------------------------------------------
# BPR loss kernel (batch-tiled, SMEM accumulator, fused regularizer)
# ----------------------------------------------------------------------------
def _bpr_kernel(u_ref, p_ref, n_ref, out_ref, acc_ref, *, lmbd, batch, tb):
    pid = pl.program_id(0)

    @pl.when(pid == 0)
    def _():
        acc_ref[0] = 0.0
        acc_ref[1] = 0.0

    u = u_ref[...].astype(jnp.float32)
    p = p_ref[...].astype(jnp.float32)
    n = n_ref[...].astype(jnp.float32)

    # Mask rows of the (possibly ragged) last tile.
    row = pid * tb + jax.lax.broadcasted_iota(jnp.int32, (tb, 1), 0)
    valid = row < batch

    pos_scores = jnp.sum(u * p, axis=1, keepdims=True)   # [TB, 1]
    neg_scores = jnp.sum(u * n, axis=1, keepdims=True)   # [TB, 1]
    x = pos_scores - neg_scores

    # numerically stable logsigmoid(x) = min(x, 0) - log(1 + exp(-|x|))
    logsig = jnp.minimum(x, 0.0) - jnp.log(1.0 + jnp.exp(-jnp.abs(x)))
    mf_partial = jnp.sum(jnp.where(valid, logsig, 0.0))

    # Fused regularizer: one cross-lane reduction instead of three.
    sq_row = jnp.sum(u * u + p * p + n * n, axis=1, keepdims=True)
    reg_partial = jnp.sum(jnp.where(valid, sq_row, 0.0))

    acc_ref[0] += mf_partial
    acc_ref[1] += reg_partial

    @pl.when(pid == pl.num_programs(0) - 1)
    def _():
        inv_b = 1.0 / jnp.float32(batch)
        mf_loss = -(acc_ref[0] * inv_b)
        emb_loss = jnp.float32(lmbd) * acc_ref[1] * 0.5 * inv_b
        out_ref[0] = mf_loss + emb_loss
        out_ref[1] = mf_loss
        out_ref[2] = emb_loss


def create_bpr_loss(users, pos_items, neg_items, lmbd, *, tile_batch=None):
    batch, dim = users.shape
    itemsize = jnp.dtype(users.dtype).itemsize
    tb = tile_batch if tile_batch is not None else _pick_batch_tile(
        batch, dim, n_arrays=3, itemsize=itemsize)
    num_tiles = pl.cdiv(batch, tb)

    kernel = functools.partial(
        _bpr_kernel, lmbd=float(lmbd), batch=int(batch), tb=int(tb))
    emb_spec = pl.BlockSpec((tb, dim), lambda i: (i, 0))

    out = pl.pallas_call(
        kernel,
        out_shape=jax.ShapeDtypeStruct((3,), jnp.float32),
        grid=(num_tiles,),
        in_specs=[emb_spec, emb_spec, emb_spec],
        out_specs=pl.BlockSpec(memory_space=pltpu.MemorySpace.SMEM),
        scratch_shapes=[pltpu.SMEM((2,), jnp.float32)],
        compiler_params=pltpu.CompilerParams(
            dimension_semantics=("arbitrary",)),
        cost_estimate=pl.CostEstimate(
            flops=10 * batch * dim,
            transcendentals=2 * batch,
            bytes_accessed=3 * batch * dim * itemsize + 12),
    )(users, pos_items, neg_items)
    return out[0], out[1], out[2]


# ----------------------------------------------------------------------------
# Cross-entropy (BCE) loss kernel (batch-tiled, softplus form from logits)
# ----------------------------------------------------------------------------
def _ce_kernel(u_ref, i_ref, t_ref, out_ref, acc_ref, *, lmbd, batch, tb):
    pid = pl.program_id(0)

    @pl.when(pid == 0)
    def _():
        acc_ref[0] = 0.0
        acc_ref[1] = 0.0

    u = u_ref[...].astype(jnp.float32)
    it = i_ref[...].astype(jnp.float32)
    t = t_ref[...].astype(jnp.float32)                    # [TB, 1]

    row = pid * tb + jax.lax.broadcasted_iota(jnp.int32, (tb, 1), 0)
    valid = row < batch

    logits = jnp.sum(u * it, axis=1, keepdims=True)       # [TB, 1]
    # BCE(sigmoid(x), t) = softplus(x) - t*x, stable form (1 exp, 1 log per row)
    softplus = jnp.maximum(logits, 0.0) + jnp.log(1.0 + jnp.exp(-jnp.abs(logits)))
    bce = softplus - t * logits
    mf_partial = jnp.sum(jnp.where(valid, bce, 0.0))

    sq_row = jnp.sum(u * u + it * it, axis=1, keepdims=True)
    reg_partial = jnp.sum(jnp.where(valid, sq_row, 0.0))

    acc_ref[0] += mf_partial
    acc_ref[1] += reg_partial

    @pl.when(pid == pl.num_programs(0) - 1)
    def _():
        inv_b = 1.0 / jnp.float32(batch)
        mf_loss = acc_ref[0] * inv_b
        emb_loss = jnp.float32(lmbd) * acc_ref[1] * 0.5 * inv_b
        out_ref[0] = mf_loss + emb_loss
        out_ref[1] = mf_loss
        out_ref[2] = emb_loss


def create_cross_entropy_loss(users, items, target, lmbd, w=15.0, *, tile_batch=None):
    # TODO(synk): `w` is unused in the reference PyTorch implementation; kept for signature parity.
    batch, dim = users.shape
    itemsize = jnp.dtype(users.dtype).itemsize
    tb = tile_batch if tile_batch is not None else _pick_batch_tile(
        batch, dim, n_arrays=2, itemsize=itemsize)
    num_tiles = pl.cdiv(batch, tb)

    target2d = target.reshape(batch, 1)
    kernel = functools.partial(
        _ce_kernel, lmbd=float(lmbd), batch=int(batch), tb=int(tb))
    emb_spec = pl.BlockSpec((tb, dim), lambda i: (i, 0))
    tgt_spec = pl.BlockSpec((tb, 1), lambda i: (i, 0))

    out = pl.pallas_call(
        kernel,
        out_shape=jax.ShapeDtypeStruct((3,), jnp.float32),
        grid=(num_tiles,),
        in_specs=[emb_spec, emb_spec, tgt_spec],
        out_specs=pl.BlockSpec(memory_space=pltpu.MemorySpace.SMEM),
        scratch_shapes=[pltpu.SMEM((2,), jnp.float32)],
        compiler_params=pltpu.CompilerParams(
            dimension_semantics=("arbitrary",)),
        cost_estimate=pl.CostEstimate(
            flops=7 * batch * dim,
            transcendentals=2 * batch,
            bytes_accessed=2 * batch * dim * itemsize + 4 * batch + 12),
    )(users, items, target2d)
    return out[0], out[1], out[2]


# ----------------------------------------------------------------------------
# Rating kernel: users @ items.T, tiled 2D grid, NT dot_general on the MXU
# ----------------------------------------------------------------------------
def _rating_kernel(u_ref, i_ref, o_ref):
    # Contract on the last axis of both operands (NT form): no in-kernel transpose.
    o_ref[...] = jax.lax.dot_general(
        u_ref[...], i_ref[...],
        dimension_numbers=(((1,), (1,)), ((), ())),
        preferred_element_type=jnp.float32,
    ).astype(o_ref.dtype)


def rating(u_g_embeddings, pos_i_g_embeddings, *, tile_m=None, tile_n=None):
    n_u, dim = u_g_embeddings.shape
    n_i, _ = pos_i_g_embeddings.shape
    itemsize = jnp.dtype(u_g_embeddings.dtype).itemsize

    tm_def, tn_def = _rating_tiles(n_u, n_i, dim, itemsize)
    tm = tile_m if tile_m is not None else tm_def
    tn = tile_n if tile_n is not None else tn_def
    grid = (pl.cdiv(n_u, tm), pl.cdiv(n_i, tn))

    bytes_accessed = (n_u * dim * itemsize * grid[1]
                      + n_i * dim * itemsize * grid[0]
                      + n_u * n_i * 4)

    return pl.pallas_call(
        _rating_kernel,
        out_shape=jax.ShapeDtypeStruct((n_u, n_i), jnp.float32),
        grid=grid,
        in_specs=[pl.BlockSpec((tm, dim), lambda i, j: (i, 0)),
                  pl.BlockSpec((tn, dim), lambda i, j: (j, 0))],
        out_specs=pl.BlockSpec((tm, tn), lambda i, j: (i, j)),
        compiler_params=pltpu.CompilerParams(
            dimension_semantics=("parallel", "parallel")),
        cost_estimate=pl.CostEstimate(
            flops=2 * n_u * n_i * dim,
            transcendentals=0,
            bytes_accessed=bytes_accessed),
    )(u_g_embeddings, pos_i_g_embeddings)


# ----------------------------------------------------------------------------
# Pure-JAX references (for correctness check)
# ----------------------------------------------------------------------------
def _bpr_ref(u, p, n, lmbd):
    pos = jnp.sum(u * p, axis=1)
    neg = jnp.sum(u * n, axis=1)
    mf = -jnp.mean(jax.nn.log_sigmoid(pos - neg))
    reg = (jnp.sum(u**2) + jnp.sum(p**2) + jnp.sum(n**2)) / 2.0
    emb = lmbd * reg / u.shape[0]
    return mf + emb, mf, emb


def _ce_ref(u, it, t, lmbd):
    logits = jnp.sum(u * it, axis=1)
    mf = jnp.mean(jax.nn.softplus(logits) - t * logits)
    reg = (jnp.sum(u**2) + jnp.sum(it**2)) / 2.0
    emb = lmbd * reg / u.shape[0]
    return mf + emb, mf, emb


if __name__ == "__main__":
    lmbd = 1e-3
    key = jax.random.PRNGKey(0)

    # ---------------- small, single-tile shapes ----------------
    batch, dim, n_items = 8, 32, 16
    k_u, k_p, k_n, k_t, k_iu, k_ii = jax.random.split(key, 6)
    users = jax.random.normal(k_u, (batch, dim), dtype=jnp.float32) * 0.1
    pos_items = jax.random.normal(k_p, (batch, dim), dtype=jnp.float32) * 0.1
    neg_items = jax.random.normal(k_n, (batch, dim), dtype=jnp.float32) * 0.1
    target = (jax.random.uniform(k_t, (batch,)) > 0.5).astype(jnp.float32)
    u_emb = jax.random.normal(k_iu, (batch, dim), dtype=jnp.float32) * 0.1
    i_emb = jax.random.normal(k_ii, (n_items, dim), dtype=jnp.float32) * 0.1

    total, mf, emb = create_bpr_loss(users, pos_items, neg_items, lmbd)
    jax.block_until_ready((total, mf, emb))
    rt, rm, re = _bpr_ref(users, pos_items, neg_items, lmbd)
    assert jnp.allclose(total, rt, atol=1e-5), (total, rt)
    assert jnp.allclose(mf, rm, atol=1e-5)
    assert jnp.allclose(emb, re, atol=1e-6)

    ctot, cmf, cemb = create_cross_entropy_loss(users, pos_items, target, lmbd)
    jax.block_until_ready((ctot, cmf, cemb))
    rct, rcm, rce = _ce_ref(users, pos_items, target, lmbd)
    assert jnp.allclose(ctot, rct, atol=1e-5), (ctot, rct)
    assert jnp.allclose(cmf, rcm, atol=1e-5)
    assert jnp.allclose(cemb, rce, atol=1e-6)

    scores = rating(u_emb, i_emb)
    jax.block_until_ready(scores)
    assert jnp.allclose(scores, u_emb @ i_emb.T, atol=1e-4)

    # ---------------- multi-tile / ragged-tile path ----------------
    batch2, dim2 = 20, 32
    k2 = jax.random.split(jax.random.PRNGKey(1), 6)
    u2 = jax.random.normal(k2[0], (batch2, dim2), dtype=jnp.float32) * 0.1
    p2 = jax.random.normal(k2[1], (batch2, dim2), dtype=jnp.float32) * 0.1
    n2 = jax.random.normal(k2[2], (batch2, dim2), dtype=jnp.float32) * 0.1
    t2 = (jax.random.uniform(k2[3], (batch2,)) > 0.5).astype(jnp.float32)

    tot2, mf2, emb2 = create_bpr_loss(u2, p2, n2, lmbd, tile_batch=8)
    jax.block_until_ready((tot2, mf2, emb2))
    rt2, rm2, re2 = _bpr_ref(u2, p2, n2, lmbd)
    assert jnp.allclose(tot2, rt2, atol=1e-5), (tot2, rt2)
    assert jnp.allclose(mf2, rm2, atol=1e-5)
    assert jnp.allclose(emb2, re2, atol=1e-6)

    ct2, cm2, ce2 = create_cross_entropy_loss(u2, p2, t2, lmbd, tile_batch=8)
    jax.block_until_ready((ct2, cm2, ce2))
    rct2, rcm2, rce2 = _ce_ref(u2, p2, t2, lmbd)
    assert jnp.allclose(ct2, rct2, atol=1e-5), (ct2, rct2)
    assert jnp.allclose(cm2, rcm2, atol=1e-5)
    assert jnp.allclose(ce2, rce2, atol=1e-6)

    n_u2, n_i2 = 24, 256
    u3 = jax.random.normal(k2[4], (n_u2, dim2), dtype=jnp.float32) * 0.1
    i3 = jax.random.normal(k2[5], (n_i2, dim2), dtype=jnp.float32) * 0.1
    scores2 = rating(u3, i3, tile_m=16, tile_n=128)   # ragged M tile, 2x2 grid
    jax.block_until_ready(scores2)
    assert jnp.allclose(scores2, u3 @ i3.T, atol=1e-4)

    print("KERNEL_OK")
</pallas_src>

<mosaic_0001>
module attributes {stable_mosaic.version = 11 : i64} {
  func.func @_bpr_kernel(%arg0: i32, %arg1: memref<8x32xf32, #tpu.memory_space<vmem>>, %arg2: memref<8x32xf32, #tpu.memory_space<vmem>>, %arg3: memref<8x32xf32, #tpu.memory_space<vmem>>, %arg4: memref<3xf32, #tpu.memory_space<smem>>, %arg5: memref<2xf32, #tpu.memory_space<smem>>) attributes {dimension_semantics = [#tpu.dimension_semantics<arbitrary>], iteration_bounds = array<i64: 1>, scalar_prefetch = 0 : i64, scratch_operands = 1 : i64, tpu.core_type = #tpu.core_type<tc>, window_params = [{transform_indices = @transform_0, window_bounds = array<i64: 8, 32>}, {transform_indices = @transform_1, window_bounds = array<i64: 8, 32>}, {transform_indices = @transform_2, window_bounds = array<i64: 8, 32>}, {transform_indices = @transform_3, window_bounds = array<i64: 3>}]} {
    %c0_i32 = arith.constant 0 : i32
    %0 = arith.cmpi eq, %arg0, %c0_i32 : i32
    %1 = arith.extui %0 : i1 to i32
    %c0_i32_0 = arith.constant 0 : i32
    %2 = arith.cmpi ne, %1, %c0_i32_0 : i32
    scf.if %2 {
      %cst_21 = arith.constant 0.000000e+00 : f32
      %c0_22 = arith.constant 0 : index
      %57 = memref.load %arg5[%c0_22] : memref<2xf32, #tpu.memory_space<smem>>
      memref.store %cst_21, %arg5[%c0_22] : memref<2xf32, #tpu.memory_space<smem>>
      %cst_23 = arith.constant 0.000000e+00 : f32
      %c1_24 = arith.constant 1 : index
      %58 = memref.load %arg5[%c1_24] : memref<2xf32, #tpu.memory_space<smem>>
      memref.store %cst_23, %arg5[%c1_24] : memref<2xf32, #tpu.memory_space<smem>>
    } else {
    }
    %c0 = arith.constant 0 : index
    %c0_1 = arith.constant 0 : index
    %3 = vector.load %arg1[%c0, %c0_1] : memref<8x32xf32, #tpu.memory_space<vmem>>, vector<8x32xf32>
    %c0_2 = arith.constant 0 : index
    %c0_3 = arith.constant 0 : index
    %4 = vector.load %arg2[%c0_2, %c0_3] : memref<8x32xf32, #tpu.memory_space<vmem>>, vector<8x32xf32>
    %c0_4 = arith.constant 0 : index
    %c0_5 = arith.constant 0 : index
    %5 = vector.load %arg3[%c0_4, %c0_5] : memref<8x32xf32, #tpu.memory_space<vmem>>, vector<8x32xf32>
    %c8_i32 = arith.constant 8 : i32
    %6 = arith.muli %arg0, %c8_i32 : i32
    %7 = tpu.iota {dimensions = array<i32: 0>} : vector<8x1xi32>
    %8 = vector.broadcast %6 : i32 to vector<8x1xi32>
    %9 = arith.addi %8, %7 : vector<8x1xi32>
    %c8_i32_6 = arith.constant 8 : i32
    %10 = vector.broadcast %c8_i32_6 : i32 to vector<8x1xi32>
    %11 = arith.cmpi slt, %9, %10 : vector<8x1xi32>
    %12 = arith.mulf %3, %4 : vector<8x32xf32>
    %cst = arith.constant dense<0.000000e+00> : vector<8xf32>
    %13 = vector.multi_reduction <add>, %12, %cst [1] : vector<8x32xf32> to vector<8xf32>
    %14 = vector.shape_cast %13 : vector<8xf32> to vector<8x1xf32>
    %15 = arith.mulf %3, %5 : vector<8x32xf32>
    %cst_7 = arith.constant dense<0.000000e+00> : vector<8xf32>
    %16 = vector.multi_reduction <add>, %15, %cst_7 [1] : vector<8x32xf32> to vector<8xf32>
    %17 = vector.shape_cast %16 : vector<8xf32> to vector<8x1xf32>
    %18 = arith.subf %14, %17 : vector<8x1xf32>
    %cst_8 = arith.constant 0.000000e+00 : f32
    %19 = vector.broadcast %cst_8 : f32 to vector<8x1xf32>
    %20 = arith.minimumf %18, %19 : vector<8x1xf32>
    %21 = math.absf %18 : vector<8x1xf32>
    %cst_9 = arith.constant 0.000000e+00 : f32
    %22 = vector.broadcast %cst_9 : f32 to vector<8x1xf32>
    %23 = arith.subf %22, %21 : vector<8x1xf32>
    %24 = math.exp %23 : vector<8x1xf32>
    %cst_10 = arith.constant 1.000000e+00 : f32
    %25 = vector.broadcast %cst_10 : f32 to vector<8x1xf32>
    %26 = arith.addf %25, %24 : vector<8x1xf32>
    %27 = math.log %26 : vector<8x1xf32>
    %28 = arith.subf %20, %27 : vector<8x1xf32>
    %cst_11 = arith.constant 0.000000e+00 : f32
    %29 = vector.broadcast %cst_11 : f32 to vector<8x1xf32>
    %30 = arith.select %11, %28, %29 : vector<8x1xi1>, vector<8x1xf32>
    %31 = vector.shape_cast %30 : vector<8x1xf32> to vector<1x8x1xf32>
    %cst_12 = arith.constant dense<0.000000e+00> : vector<1xf32>
    %32 = vector.multi_reduction <add>, %31, %cst_12 [1, 2] : vector<1x8x1xf32> to vector<1xf32>
    %33 = vector.shape_cast %32 : vector<1xf32> to vector<1x1x1xf32>
    %34 = vector.extract %33[0, 0, 0] : f32 from vector<1x1x1xf32>
    %35 = arith.mulf %3, %3 : vector<8x32xf32>
    %36 = arith.mulf %4, %4 : vector<8x32xf32>
    %37 = arith.addf %35, %36 : vector<8x32xf32>
    %38 = arith.mulf %5, %5 : vector<8x32xf32>
    %39 = arith.addf %37, %38 : vector<8x32xf32>
    %cst_13 = arith.constant dense<0.000000e+00> : vector<8xf32>
    %40 = vector.multi_reduction <add>, %39, %cst_13 [1] : vector<8x32xf32> to vector<8xf32>
    %41 = vector.shape_cast %40 : vector<8xf32> to vector<8x1xf32>
    %cst_14 = arith.constant 0.000000e+00 : f32
    %42 = vector.broadcast %cst_14 : f32 to vector<8x1xf32>
    %43 = arith.select %11, %41, %42 : vector<8x1xi1>, vector<8x1xf32>
    %44 = vector.shape_cast %43 : vector<8x1xf32> to vector<1x8x1xf32>
    %cst_15 = arith.constant dense<0.000000e+00> : vector<1xf32>
    %45 = vector.multi_reduction <add>, %44, %cst_15 [1, 2] : vector<1x8x1xf32> to vector<1xf32>
    %46 = vector.shape_cast %45 : vector<1xf32> to vector<1x1x1xf32>
    %47 = vector.extract %46[0, 0, 0] : f32 from vector<1x1x1xf32>
    %c0_16 = arith.constant 0 : index
    %48 = memref.load %arg5[%c0_16] : memref<2xf32, #tpu.memory_space<smem>>
    %49 = arith.addf %48, %34 : f32
    %c0_17 = arith.constant 0 : index
    %50 = memref.load %arg5[%c0_17] : memref<2xf32, #tpu.memory_space<smem>>
    memref.store %49, %arg5[%c0_17] : memref<2xf32, #tpu.memory_space<smem>>
    %c1 = arith.constant 1 : index
    %51 = memref.load %arg5[%c1] : memref<2xf32, #tpu.memory_space<smem>>
    %52 = arith.addf %51, %47 : f32
    %c1_18 = arith.constant 1 : index
    %53 = memref.load %arg5[%c1_18] : memref<2xf32, #tpu.memory_space<smem>>
    memref.store %52, %arg5[%c1_18] : memref<2xf32, #tpu.memory_space<smem>>
    %c0_i32_19 = arith.constant 0 : i32
    %54 = arith.cmpi eq, %arg0, %c0_i32_19 : i32
    %55 = arith.extui %54 : i1 to i32
    %c0_i32_20 = arith.constant 0 : i32
    %56 = arith.cmpi ne, %55, %c0_i32_20 : i32
    scf.if %56 {
      %cst_21 = arith.constant 1.000000e+00 : f32
      %cst_22 = arith.constant 8.000000e+00 : f32
      %57 = arith.divf %cst_21, %cst_22 : f32
      %c0_23 = arith.constant 0 : index
      %58 = memref.load %arg5[%c0_23] : memref<2xf32, #tpu.memory_space<smem>>
      %59 = arith.mulf %58, %57 : f32
      %cst_24 = arith.constant 0.000000e+00 : f32
      %60 = arith.subf %cst_24, %59 : f32
      %c1_25 = arith.constant 1 : index
      %61 = memref.load %arg5[%c1_25] : memref<2xf32, #tpu.memory_space<smem>>
      %cst_26 = arith.constant 1.000000e-03 : f32
      %62 = arith.mulf %cst_26, %61 : f32
      %cst_27 = arith.constant 5.000000e-01 : f32
      %63 = arith.mulf %62, %cst_27 : f32
      %64 = arith.mulf %63, %57 : f32
      %65 = arith.addf %60, %64 : f32
      %c0_28 = arith.constant 0 : index
      %66 = memref.load %arg4[%c0_28] : memref<3xf32, #tpu.memory_space<smem>>
      memref.store %65, %arg4[%c0_28] : memref<3xf32, #tpu.memory_space<smem>>
      %c1_29 = arith.constant 1 : index
      %67 = memref.load %arg4[%c1_29] : memref<3xf32, #tpu.memory_space<smem>>
      memref.store %60, %arg4[%c1_29] : memref<3xf32, #tpu.memory_space<smem>>
      %c2 = arith.constant 2 : index
      %68 = memref.load %arg4[%c2] : memref<3xf32, #tpu.memory_space<smem>>
      memref.store %64, %arg4[%c2] : memref<3xf32, #tpu.memory_space<smem>>
    } else {
    }
    return
  }
  func.func @transform_0(%arg0: i32) -> (i32, i32) {
    %c0_i32 = arith.constant 0 : i32
    %c0_i32_0 = arith.constant 0 : i32
    return %arg0, %c0_i32 : i32, i32
  }
  func.func @transform_1(%arg0: i32) -> (i32, i32) {
    %c0_i32 = arith.constant 0 : i32
    %c0_i32_0 = arith.constant 0 : i32
    return %arg0, %c0_i32 : i32, i32
  }
  func.func @transform_2(%arg0: i32) -> (i32, i32) {
    %c0_i32 = arith.constant 0 : i32
    %c0_i32_0 = arith.constant 0 : i32
    return %arg0, %c0_i32 : i32, i32
  }
  func.func @transform_3(%arg0: i32) -> i32 {
    %c0_i32 = arith.constant 0 : i32
    %c0_i32_0 = arith.constant 0 : i32
    return %c0_i32 : i32
  }
}

</mosaic_0001>

<llo_original>
// kernel: tpu_custom_call.1
$region0: #{tpu_custom_call.1}
  #allocation0 [shape = 'u32[]', space=smem, size = 0x4, offset = 0x4, fixed_abs, tag = 'smem constant byte address 0x4 - core index']
  #allocation1 [shape = 'u32[72,128]{1,0:T(1,128)}', space=vmem, size = 0x9000, scoped, tag = 'internal scratch']
  #allocation2 [shape = 'f32[2]{0:T(128)}', space=smem, size = 0x200, scoped, tag = 'scratch operand']
  %s0 = inlined_call_operand.hbm [shape: f32[8,32], index: 0, kind: input, shape index: {}]
  %s1 = inlined_call_operand.hbm [shape: f32[8,32], index: 1, kind: input, shape index: {}]
  %s2 = inlined_call_operand.hbm [shape: f32[8,32], index: 2, kind: input, shape index: {}]
  %s3 = inlined_call_operand.hbm [shape: f32[3], index: 3, kind: output, shape index: {}]
  %s4 = sld [smem:[#allocation0]]
  $region42: #{tpu_custom_call.1} parent=0
    _
  %s6 = ssub.s32 1, %s4
  %s7 = scalar_select 0, %s6, %s4
  $region1: #{tpu_custom_call.1} parent=0
    #allocation3 [shape = 'u8[4096]{0}', space=vmem, size = 0x1000, scoped, tag = 'input window, operand 0, single buffered']
    #allocation4 [shape = 's32[1]{0}', space=sflag, size = 0x4, scoped, tag = 'scoped memory for tpu_custom_call.1']
    #allocation5 [shape = 's32[1]{0}', space=sflag, size = 0x4, scoped, tag = 'scoped memory for tpu_custom_call.1']
    #allocation6 [shape = 'u8[4096]{0}', space=vmem, size = 0x1000, scoped, tag = 'input window, operand 1, single buffered']
    #allocation7 [shape = 's32[1]{0}', space=sflag, size = 0x4, scoped, tag = 'scoped memory for tpu_custom_call.1']
    #allocation8 [shape = 'u8[4096]{0}', space=vmem, size = 0x1000, scoped, tag = 'input window, operand 2, single buffered']
    #allocation9 [shape = 'u8[512]{0}', space=smem, size = 0x200, scoped, tag = 'output window, operand 0, single buffered']
    %8 = vsyncpa [#allocation4], 0
    %9 = vsyncpa [#allocation7], 0
    %10 = vsyncpa [#allocation5], 0
    // Predicated region
    $region2: #{tpu_custom_call.1} parent=1 // pred_check
      _
    $region3: #{tpu_custom_call.1} parent=1 // pred_check_branch
      %12 = sbr.rel (0) target = $region5
    $region4: #{tpu_custom_call.1} parent=1 // pred_region
      %14 = vsyncadd [#allocation4], 0
      %s16 = sshll.u32 %s0, 4
      %s17 = int_to_ptr.hbm [resolvable:$true] %s16
      %s18 = sshll.u32 [#allocation3], 4
      %s19 = int_to_ptr.vmem [resolvable:$true] %s18
      %21 = dma.hbm_to_vmem [thread:$0]  %s17, 128, %s19, [#allocation4]
    $region5: #{tpu_custom_call.1} parent=1 // pred_fallthru
      _
    // Predicated region
    $region6: #{tpu_custom_call.1} parent=1 // pred_check
      _
    $region7: #{tpu_custom_call.1} parent=1 // pred_check_branch
      %23 = sbr.rel (0) target = $region9
    $region8: #{tpu_custom_call.1} parent=1 // pred_region
      %25 = vsyncadd [#allocation7], 0
      %s27 = sshll.u32 %s1, 4
      %s28 = int_to_ptr.hbm [resolvable:$true] %s27
      %s29 = sshll.u32 [#allocation6], 4
      %s30 = int_to_ptr.vmem [resolvable:$true] %s29
      %32 = dma.hbm_to_vmem [thread:$0]  %s28, 128, %s30, [#allocation7]
    $region9: #{tpu_custom_call.1} parent=1 // pred_fallthru
      _
    // Predicated region
    $region10: #{tpu_custom_call.1} parent=1 // pred_check
      _
    $region11: #{tpu_custom_call.1} parent=1 // pred_check_branch
      %34 = sbr.rel (0) target = $region13
    $region12: #{tpu_custom_call.1} parent=1 // pred_region
      %36 = vsyncadd [#allocation7], 0
      %s38 = sshll.u32 %s2, 4
      %s39 = int_to_ptr.hbm [resolvable:$true] %s38
      %s40 = sshll.u32 [#allocation8], 4
      %s41 = int_to_ptr.vmem [resolvable:$true] %s40
      %43 = dma.hbm_to_vmem [thread:$0]  %s39, 128, %s41, [#allocation7]
    $region13: #{tpu_custom_call.1} parent=1 // pred_fallthru
      _
    // Predicated region
    $region14: #{tpu_custom_call.1} parent=1 // pred_check
      _
    $region15: #{tpu_custom_call.1} parent=1 // pred_check_branch
      %45 = sbr.rel (0) target = $region17
    $region16: #{tpu_custom_call.1} parent=1 // pred_region
      %47 = dma.done [#allocation4], 128
    $region17: #{tpu_custom_call.1} parent=1 // pred_fallthru
      _
    // Predicated region
    $region18: #{tpu_custom_call.1} parent=1 // pred_check
      _
    $region19: #{tpu_custom_call.1} parent=1 // pred_check_branch
      %49 = sbr.rel (0) target = $region21
    $region20: #{tpu_custom_call.1} parent=1 // pred_region
      %51 = dma.done [#allocation7], 128
    $region21: #{tpu_custom_call.1} parent=1 // pred_fallthru
      _
    // Predicated region
    $region22: #{tpu_custom_call.1} parent=1 // pred_check
      _
    $region23: #{tpu_custom_call.1} parent=1 // pred_check_branch
      %53 = sbr.rel (0) target = $region25
    $region24: #{tpu_custom_call.1} parent=1 // pred_region
      %55 = dma.done [#allocation7], 128
    $region25: #{tpu_custom_call.1} parent=1 // pred_fallthru
      _
    %p56 = scmp.eq.s32.totalorder 0, 0
    // Predicated region
    $region26: #{tpu_custom_call.1} parent=1 // pred_check
      %p57 = pneg %p56
    $region27: #{tpu_custom_call.1} parent=1 // pred_check_branch
      %59 = sbr.rel (%p57) target = $region29
    $region28: #{tpu_custom_call.1} parent=1 // pred_region
      %s60 = scalar_lea.smem [#allocation2], 0
      %61 = sst [smem:[%s60]] 0.0
      %s62 = scalar_lea.smem [#allocation2], 1
      %63 = sst [smem:[%s62]] 0.0
    $region29: #{tpu_custom_call.1} parent=1 // pred_fallthru
      _
    %v64 = vld [vmem:[#allocation3] sm:$0xff]
    %v65 = vld [vmem:[#allocation6] sm:$0xff]
    %v66 = vld [vmem:[#allocation8] sm:$0xff]
    %s67 = smul.u32 0, 8
    %v68 = vlaneseq
    %v69 = vshrl.u32 %v68, 7
    %v70 = vstv %s67
    %v71 = vadd.s32 %v70, %v69
    %vm72 = vcmp.lt.s32.totalorder %v71, 8
    %v73 = vmul.f32 %v64, %v65
    %vm74 = vcmask 261120
    %v75 = vsel %vm74, %v73, 0.0
    %76 = vadd.xlane.f32.xlu0 %v75
    %v77 = vpop.xlane.xlu0 %76
    %v78 = vmul.f32 %v64, %v66
    %v79 = vsel %vm74, %v78, 0.0
    %80 = vadd.xlane.f32.xlu0 %v79
    %v81 = vpop.xlane.xlu0 %80
    %v82 = vsub.f32 %v77, %v81
    %v83 = vmin.f32 %v82, 0.0
    %v84 = vand.u32 2147483647, %v82
    %v85 = vsub.f32 0.0, %v84
    %v86 = vmul.f32 %v85, 1.442695
    %v87 = vpow.pop %v86
    %v88 = vadd.f32 %v87, 1.0
    %v89 = vlog2.pop %v88
    %v90 = vmul.f32 %v89, 0.6931472
    %v91 = vsub.f32 %v83, %v90
    %v92 = vsel %vm72, %v91, 0.0
    %vm93 = vcmask 7168
    %v94 = vsel %vm93, %v92, 0.0
    %95 = vadd.xlane.f32.xlu0 %v94
    %v96 = vpop.xlane.xlu0 %95
    %v97 = vrot.slane %v96, 4
    %v98 = vadd.f32 %v96, %v97
    %v99 = vrot.slane %v98, 2
    %v100 = vadd.f32 %v98, %v99
    %v101 = vrot.slane %v100, 1
    %v102 = vadd.f32 %v100, %v101
    %s103 = vtos %v102
    %v104 = vmul.f32 %v64, %v64
    %v105 = vmul.f32 %v65, %v65
    %v106 = vadd.f32 %v104, %v105
    %v107 = vmul.f32 %v66, %v66
    %v108 = vadd.f32 %v106, %v107
    %v109 = vsel %vm74, %v108, 0.0
    %110 = vadd.xlane.f32.xlu0 %v109
    %v111 = vpop.xlane.xlu0 %110
    %v112 = vsel %vm72, %v111, 0.0
    %v113 = vsel %vm93, %v112, 0.0
    %114 = vadd.xlane.f32.xlu0 %v113
    %v115 = vpop.xlane.xlu0 %114
    %v116 = vrot.slane %v115, 4
    %v117 = vadd.f32 %v115, %v116
    %v118 = vrot.slane %v117, 2
    %v119 = vadd.f32 %v117, %v118
    %v120 = vrot.slane %v119, 1
    %v121 = vadd.f32 %v119, %v120
    %s122 = vtos %v121
    %s123 = sld [smem:[#allocation2]]
    %s124 = sadd.f32 %s123, %s103
    %s125 = scalar_lea.smem [#allocation2], 0
    %126 = sst [smem:[%s125]] %s124
    %s127 = sld [smem:[#allocation2 + $0x1]]
    %s128 = sadd.f32 %s127, %s122
    %s129 = scalar_lea.smem [#allocation2], 1
    %130 = sst [smem:[%s129]] %s128
    // Predicated region
    $region30: #{tpu_custom_call.1} parent=1 // pred_check
      %p131 = pneg %p56
    $region31: #{tpu_custom_call.1} parent=1 // pred_check_branch
      %133 = sbr.rel (%p131) target = $region33
    $region32: #{tpu_custom_call.1} parent=1 // pred_region
      %s134 = sld [smem:[#allocation2]]
      %s135 = smul.f32 %s134, 0.125
      %s136 = ssub.f32 0.0, %s135
      %s137 = sld [smem:[#allocation2 + $0x1]]
      %s138 = smul.f32 %s137, 0.001
      %s139 = smul.f32 %s138, 0.5
      %s140 = smul.f32 %s139, 0.125
      %s141 = sadd.f32 %s136, %s140
      %s142 = scalar_lea.smem [#allocation9], 0
      %143 = sst [smem:[%s142]] %s141
      %s144 = scalar_lea.smem [#allocation9], 1
      %145 = sst [smem:[%s144]] %s136
      %s146 = scalar_lea.smem [#allocation9], 2
      %147 = sst [smem:[%s146]] %s140
    $region33: #{tpu_custom_call.1} parent=1 // pred_fallthru
      _
    // Predicated region
    $region34: #{tpu_custom_call.1} parent=1 // pred_check
      _
    $region35: #{tpu_custom_call.1} parent=1 // pred_check_branch
      %149 = sbr.rel (0) target = $region37
    $region36: #{tpu_custom_call.1} parent=1 // pred_region
      %151 = vsyncadd [#allocation5], 0
      %s153 = sshll.u32 %s3, 4
      %s154 = int_to_ptr.hbm [resolvable:$true] %s153
      %156 = dma.smem_to_hbm [#allocation9], 16, %s154, [#allocation5]
    $region37: #{tpu_custom_call.1} parent=1 // pred_fallthru
      _
    // Predicated region
    $region38: #{tpu_custom_call.1} parent=1 // pred_check
      _
    $region39: #{tpu_custom_call.1} parent=1 // pred_check_branch
      %158 = sbr.rel (0) target = $region41
    $region40: #{tpu_custom_call.1} parent=1 // pred_region
      %160 = dma.done [#allocation5], 16
    $region41: #{tpu_custom_call.1} parent=1 // pred_fallthru
      _
    %161 = sfence
    %162 = vsyncpa [#allocation4], 1
    %163 = vsyncpa [#allocation7], 1
    %164 = vsyncpa [#allocation5], 1

</llo_original>
